<compile_context>
chip_gen: v7x
topology: tpu7x:2x2x1
jax: 0.10.0
libtpu: 0.0.40
codegen_flags: <defaults>
</compile_context>

<pallas_src>
import jax
import jax.numpy as jnp
from jax.experimental import pallas as pl
from jax.experimental.pallas import tpu as pltpu

BN_EPS = 1e-5
NEG_BIG = -1e30  # padded-logit bias -> exp underflows to exactly 0


def _round_up(x, m):
    return (x + m - 1) // m * m


# -----------------------------------------------------------------------------
# Kernel: one batch tile per grid step; weights resident in VMEM.
# -----------------------------------------------------------------------------
def decoder_fc_kernel(x_ref, w1_ref, b1_ref, w2_ref, b2_ref, lib_ref, out_ref):
    # x: (TB, Din_p) bf16; w1: (Din_p, H_p) bf16; w2: (H_p, F_p) bf16
    # b1: (1, H_p) f32 (BN folded); b2: (1, F_p) f32 (-1e30 on padded cols)
    # lib: (TB, 1) f32; out: (TB, F_p) f32

    # Linear 1 (BN already folded into w1/b1), MXU bf16 -> f32 accumulate.
    h = jnp.dot(x_ref[...], w1_ref[...], preferred_element_type=jnp.float32)
    h = jnp.maximum(h + b1_ref[...], 0.0)          # bias + ReLU in f32
    # TODO(synk): Dropout(p) is identity here (eval mode).

    # Linear 2, MXU bf16 -> f32 accumulate.
    logits = jnp.dot(h.astype(jnp.bfloat16), w2_ref[...],
                     preferred_element_type=jnp.float32) + b2_ref[...]

    # Stable softmax; padded columns have logits == -1e30 -> exp == 0.
    m = jnp.max(logits, axis=-1, keepdims=True)
    e = jnp.exp(logits - m)
    denom = jnp.sum(e, axis=-1, keepdims=True)

    # Fold library_size_factor into the normalization scale (EUP reciprocal).
    scale = lib_ref[...] * pl.reciprocal(denom, approx=True)
    out_ref[...] = (e * scale).astype(out_ref.dtype)


# -----------------------------------------------------------------------------
# Parameter prep (done once in JAX): fold eval-mode BN, pad to 128, cast to bf16.
# -----------------------------------------------------------------------------
def prepare_params(params):
    inv_std = jax.lax.rsqrt(params["running_var"] + BN_EPS)   # (1, H)
    bn_scale = params["gamma"] * inv_std                      # (1, H)

    w1f = params["w1"] * bn_scale                             # (Din, H)
    b1f = (params["b1"] - params["running_mean"]) * bn_scale + params["beta"]
    w2, b2 = params["w2"], params["b2"]

    d_in, H = w1f.shape
    F = w2.shape[1]
    d_in_p = _round_up(d_in, 128)
    H_p = _round_up(H, 128)
    F_p = _round_up(F, 128)

    w1p = jnp.zeros((d_in_p, H_p), jnp.bfloat16).at[:d_in, :H].set(
        w1f.astype(jnp.bfloat16))
    b1p = jnp.zeros((1, H_p), jnp.float32).at[:, :H].set(b1f)
    w2p = jnp.zeros((H_p, F_p), jnp.bfloat16).at[:H, :F].set(
        w2.astype(jnp.bfloat16))
    # Padded output columns: bias -1e30 so softmax denominator is unaffected.
    b2p = jnp.full((1, F_p), NEG_BIG, jnp.float32).at[:, :F].set(b2)

    return {
        "w1": w1p, "b1": b1p, "w2": w2p, "b2": b2p,
        "d_in": d_in, "num_feature": F,
        "num_modality": params["num_modality"],
    }


# -----------------------------------------------------------------------------
# Forward wrapper
# -----------------------------------------------------------------------------
def decoder_fc_forward(z, batch_id, library_size_factor, prepped):
    """Returns px_z_, a list of dicts, with px_z_[0]['mean'] of shape (B, num_feature)."""
    num_modality = prepped["num_modality"]
    F = prepped["num_feature"]

    if batch_id.shape[1] > 1:
        x = jnp.concatenate([z, batch_id], axis=-1)
    else:
        x = z

    B, d_in = x.shape
    assert d_in == prepped["d_in"]
    d_in_p, H_p = prepped["w1"].shape
    F_p = prepped["w2"].shape[1]

    # Batch tiling: TB up to 256 rows, padded so TB | B_pad and TB % 8 == 0.
    B8 = _round_up(B, 8)
    TB = min(256, B8)
    B_pad = _round_up(B8, TB)
    n_tiles = B_pad // TB

    xp = jnp.zeros((B_pad, d_in_p), jnp.bfloat16).at[:B, :d_in].set(
        x.astype(jnp.bfloat16))
    libp = jnp.zeros((B_pad, 1), jnp.float32).at[:B, :].set(
        library_size_factor.astype(jnp.float32))

    grid_spec = pltpu.PrefetchScalarGridSpec(
        num_scalar_prefetch=0,
        grid=(n_tiles,),
        in_specs=[
            pl.BlockSpec((TB, d_in_p), lambda i: (i, 0)),     # x tile (pipelined)
            pl.BlockSpec((d_in_p, H_p), lambda i: (0, 0)),    # w1 (resident)
            pl.BlockSpec((1, H_p), lambda i: (0, 0)),         # b1 (resident)
            pl.BlockSpec((H_p, F_p), lambda i: (0, 0)),       # w2 (resident)
            pl.BlockSpec((1, F_p), lambda i: (0, 0)),         # b2 (resident)
            pl.BlockSpec((TB, 1), lambda i: (i, 0)),          # lib tile
        ],
        out_specs=pl.BlockSpec((TB, F_p), lambda i: (i, 0)),
    )

    # NOTE: for very large F (10k+ genes) on v7x (64 MiB VMEM), tile F with an
    # online softmax; for these sizes everything fits in the default scoped VMEM.
    mean_pad = pl.pallas_call(
        decoder_fc_kernel,
        out_shape=jax.ShapeDtypeStruct((B_pad, F_p), jnp.float32),
        grid_spec=grid_spec,
        compiler_params=pltpu.CompilerParams(
            dimension_semantics=("parallel",)),
    )(xp, prepped["w1"], prepped["b1"], prepped["w2"], prepped["b2"], libp)

    mean = mean_pad[:B, :F]

    px_z_ = [{} for _ in range(num_modality)]
    px_z_[0]["mean"] = mean
    return px_z_


# -----------------------------------------------------------------------------
# Synthetic module parameters (same shapes as the nn.Module, f32, unfolded).
# -----------------------------------------------------------------------------
def init_params(key, num_feature, num_modality, num_sample, dim_latent,
                num_hidden_units):
    """torch.nn.Linear stores weight as (out, in); we keep the transposed
    (in, out) layout so the kernel does a plain row-major matmul."""
    d_in = dim_latent + num_sample
    ks = jax.random.split(key, 8)

    def lin_init(kw, kb, fan_in, fan_out):
        bound = 1.0 / jnp.sqrt(jnp.asarray(fan_in, jnp.float32))
        w = jax.random.uniform(kw, (fan_in, fan_out), jnp.float32, -bound, bound)
        b = jax.random.uniform(kb, (1, fan_out), jnp.float32, -bound, bound)
        return w, b

    w1, b1 = lin_init(ks[0], ks[1], d_in, num_hidden_units)
    w2, b2 = lin_init(ks[2], ks[3], num_hidden_units, num_feature)

    gamma = 1.0 + 0.1 * jax.random.normal(ks[4], (1, num_hidden_units), jnp.float32)
    beta = 0.1 * jax.random.normal(ks[5], (1, num_hidden_units), jnp.float32)
    running_mean = 0.1 * jax.random.normal(ks[6], (1, num_hidden_units), jnp.float32)
    running_var = 1.0 + 0.1 * jnp.abs(
        jax.random.normal(ks[7], (1, num_hidden_units), jnp.float32))

    return {
        "w1": w1, "b1": b1,
        "gamma": gamma, "beta": beta,
        "running_mean": running_mean, "running_var": running_var,
        "w2": w2, "b2": b2,
        "num_modality": num_modality,
    }


if __name__ == "__main__":
    # Small shapes consistent with the module.
    B = 8
    dim_latent = 16
    num_sample = 4          # > 1 -> concat(z, batch_id) branch is taken
    num_hidden_units = 32
    num_feature = 64
    num_modality = 2

    key = jax.random.PRNGKey(0)
    k_z, k_id, k_lib, k_params = jax.random.split(key, 4)

    z = jax.random.normal(k_z, (B, dim_latent), jnp.float32)
    sample_idx = jax.random.randint(k_id, (B,), 0, num_sample)
    batch_id = jax.nn.one_hot(sample_idx, num_sample, dtype=jnp.float32)
    library_size_factor = jnp.exp(jax.random.normal(k_lib, (B, 1), jnp.float32))

    params = init_params(k_params, num_feature, num_modality, num_sample,
                         dim_latent, num_hidden_units)
    prepped = prepare_params(params)

    px_z_ = decoder_fc_forward(z, batch_id, library_size_factor, prepped)
    mean = jax.block_until_ready(px_z_[0]["mean"])

    # Pure-JAX f32 reference (eval-mode BN, identity dropout) for sanity.
    x = jnp.concatenate([z, batch_id], axis=-1)
    h = x @ params["w1"] + params["b1"]
    h = (h - params["running_mean"]) * jax.lax.rsqrt(params["running_var"] + BN_EPS)
    h = jnp.maximum(h * params["gamma"] + params["beta"], 0.0)
    ref = jax.nn.softmax(h @ params["w2"] + params["b2"], axis=-1) * library_size_factor

    assert mean.shape == (B, num_feature)
    assert bool(jnp.all(jnp.isfinite(mean)))
    # bf16 matmuls + approx reciprocal -> loose tolerance vs f32 reference.
    assert bool(jnp.max(jnp.abs(mean - ref)) < 5e-2)
    print("KERNEL_OK")
</pallas_src>

<mosaic_0001>
module attributes {stable_mosaic.version = 11 : i64} {
  func.func @decoder_fc_kernel(%arg0: i32, %arg1: memref<8x128xbf16, #tpu.memory_space<vmem>>, %arg2: memref<128x128xbf16, #tpu.memory_space<vmem>>, %arg3: memref<1x128xf32, #tpu.memory_space<vmem>>, %arg4: memref<128x128xbf16, #tpu.memory_space<vmem>>, %arg5: memref<1x128xf32, #tpu.memory_space<vmem>>, %arg6: memref<8x1xf32, #tpu.memory_space<vmem>>, %arg7: memref<8x128xf32, #tpu.memory_space<vmem>>) attributes {dimension_semantics = [#tpu.dimension_semantics<parallel>], iteration_bounds = array<i64: 1>, scalar_prefetch = 0 : i64, scratch_operands = 0 : i64, tpu.core_type = #tpu.core_type<tc>, window_params = [{transform_indices = @transform_0, window_bounds = array<i64: 8, 128>}, {pipeline_mode = #tpu.pipeline_mode<synchronous>, transform_indices = @transform_1, window_bounds = array<i64: 128, 128>}, {pipeline_mode = #tpu.pipeline_mode<synchronous>, transform_indices = @transform_2, window_bounds = array<i64: 1, 128>}, {pipeline_mode = #tpu.pipeline_mode<synchronous>, transform_indices = @transform_3, window_bounds = array<i64: 128, 128>}, {pipeline_mode = #tpu.pipeline_mode<synchronous>, transform_indices = @transform_4, window_bounds = array<i64: 1, 128>}, {transform_indices = @transform_5, window_bounds = array<i64: 8, 1>}, {transform_indices = @transform_6, window_bounds = array<i64: 8, 128>}]} {
    %c0 = arith.constant 0 : index
    %c0_0 = arith.constant 0 : index
    %0 = vector.load %arg1[%c0, %c0_0] : memref<8x128xbf16, #tpu.memory_space<vmem>>, vector<8x128xbf16>
    %c0_1 = arith.constant 0 : index
    %c0_2 = arith.constant 0 : index
    %1 = vector.load %arg2[%c0_1, %c0_2] : memref<128x128xbf16, #tpu.memory_space<vmem>>, vector<128x128xbf16>
    %cst = arith.constant dense<0.000000e+00> : vector<8x128xf32>
    %2 = tpu.matmul %0, %1, %cst {dimension_numbers = #tpu.dot_dimension_numbers<[1], [0], [0], [1], [0, 0, 1, 1], [], []>} : vector<8x128xbf16>, vector<128x128xbf16>, vector<8x128xf32> -> vector<8x128xf32>
    %c0_3 = arith.constant 0 : index
    %c0_4 = arith.constant 0 : index
    %3 = vector.load %arg3[%c0_3, %c0_4] : memref<1x128xf32, #tpu.memory_space<vmem>>, vector<1x128xf32>
    %4 = vector.broadcast %3 : vector<1x128xf32> to vector<8x128xf32>
    %5 = arith.addf %2, %4 : vector<8x128xf32>
    %cst_5 = arith.constant 0.000000e+00 : f32
    %6 = vector.broadcast %cst_5 : f32 to vector<8x128xf32>
    %7 = arith.maximumf %5, %6 : vector<8x128xf32>
    %8 = arith.truncf %7 : vector<8x128xf32> to vector<8x128xbf16>
    %c0_6 = arith.constant 0 : index
    %c0_7 = arith.constant 0 : index
    %9 = vector.load %arg4[%c0_6, %c0_7] : memref<128x128xbf16, #tpu.memory_space<vmem>>, vector<128x128xbf16>
    %cst_8 = arith.constant dense<0.000000e+00> : vector<8x128xf32>
    %10 = tpu.matmul %8, %9, %cst_8 {dimension_numbers = #tpu.dot_dimension_numbers<[1], [0], [0], [1], [0, 0, 1, 1], [], []>} : vector<8x128xbf16>, vector<128x128xbf16>, vector<8x128xf32> -> vector<8x128xf32>
    %c0_9 = arith.constant 0 : index
    %c0_10 = arith.constant 0 : index
    %11 = vector.load %arg5[%c0_9, %c0_10] : memref<1x128xf32, #tpu.memory_space<vmem>>, vector<1x128xf32>
    %12 = vector.broadcast %11 : vector<1x128xf32> to vector<8x128xf32>
    %13 = arith.addf %10, %12 : vector<8x128xf32>
    %cst_11 = arith.constant dense<0xFF800000> : vector<8xf32>
    %14 = vector.multi_reduction <maximumf>, %13, %cst_11 [1] : vector<8x128xf32> to vector<8xf32>
    %15 = vector.shape_cast %14 : vector<8xf32> to vector<8x1xf32>
    %16 = vector.broadcast %15 : vector<8x1xf32> to vector<8x128xf32>
    %17 = arith.subf %13, %16 : vector<8x128xf32>
    %18 = math.exp %17 : vector<8x128xf32>
    %cst_12 = arith.constant dense<0.000000e+00> : vector<8xf32>
    %19 = vector.multi_reduction <add>, %18, %cst_12 [1] : vector<8x128xf32> to vector<8xf32>
    %20 = vector.shape_cast %19 : vector<8xf32> to vector<8x1xf32>
    %c0_13 = arith.constant 0 : index
    %c0_14 = arith.constant 0 : index
    %21 = vector.load %arg6[%c0_13, %c0_14] : memref<8x1xf32, #tpu.memory_space<vmem>>, vector<8x1xf32>
    %22 = tpu.reciprocal %20 {approx = true} : vector<8x1xf32> -> vector<8x1xf32>
    %23 = arith.mulf %21, %22 : vector<8x1xf32>
    %24 = vector.broadcast %23 : vector<8x1xf32> to vector<8x128xf32>
    %25 = arith.mulf %18, %24 : vector<8x128xf32>
    %c0_15 = arith.constant 0 : index
    %c0_16 = arith.constant 0 : index
    %26 = vector.load %arg7[%c0_15, %c0_16] : memref<8x128xf32, #tpu.memory_space<vmem>>, vector<8x128xf32>
    tpu.vector_store %arg7[%c0_15, %c0_16], %25 {strides = array<i32>} : memref<8x128xf32, #tpu.memory_space<vmem>>, vector<8x128xf32>,
    return
  }
  func.func @transform_0(%arg0: i32) -> (i32, i32) {
    %c0_i32 = arith.constant 0 : i32
    %c0_i32_0 = arith.constant 0 : i32
    return %arg0, %c0_i32 : i32, i32
  }
  func.func @transform_1(%arg0: i32) -> (i32, i32) {
    %c0_i32 = arith.constant 0 : i32
    %c0_i32_0 = arith.constant 0 : i32
    %c0_i32_1 = arith.constant 0 : i32
    return %c0_i32, %c0_i32_0 : i32, i32
  }
  func.func @transform_2(%arg0: i32) -> (i32, i32) {
    %c0_i32 = arith.constant 0 : i32
    %c0_i32_0 = arith.constant 0 : i32
    %c0_i32_1 = arith.constant 0 : i32
    return %c0_i32, %c0_i32_0 : i32, i32
  }
  func.func @transform_3(%arg0: i32) -> (i32, i32) {
    %c0_i32 = arith.constant 0 : i32
    %c0_i32_0 = arith.constant 0 : i32
    %c0_i32_1 = arith.constant 0 : i32
    return %c0_i32, %c0_i32_0 : i32, i32
  }
  func.func @transform_4(%arg0: i32) -> (i32, i32) {
    %c0_i32 = arith.constant 0 : i32
    %c0_i32_0 = arith.constant 0 : i32
    %c0_i32_1 = arith.constant 0 : i32
    return %c0_i32, %c0_i32_0 : i32, i32
  }
  func.func @transform_5(%arg0: i32) -> (i32, i32) {
    %c0_i32 = arith.constant 0 : i32
    %c0_i32_0 = arith.constant 0 : i32
    return %arg0, %c0_i32 : i32, i32
  }
  func.func @transform_6(%arg0: i32) -> (i32, i32) {
    %c0_i32 = arith.constant 0 : i32
    %c0_i32_0 = arith.constant 0 : i32
    return %arg0, %c0_i32 : i32, i32
  }
}

</mosaic_0001>

<llo_original>
// kernel: tpu_custom_call.1
$region0: #{tpu_custom_call.1}
  #allocation0 [shape = 'u32[]', space=smem, size = 0x4, offset = 0x4, fixed_abs, tag = 'smem constant byte address 0x4 - core index']
  #allocation1 [shape = 'u32[144,128]{1,0:T(1,128)}', space=vmem, size = 0x12000, scoped, tag = 'internal scratch']
  %s0 = inlined_call_operand.vmem [shape: bf16[8,128], index: 0, kind: input, shape index: {}]
  %s1 = inlined_call_operand.hbm [shape: bf16[128,128], index: 1, kind: input, shape index: {}]
  %s2 = inlined_call_operand.vmem [shape: f32[1,128], index: 2, kind: input, shape index: {}]
  %s3 = inlined_call_operand.hbm [shape: bf16[128,128], index: 3, kind: input, shape index: {}]
  %s4 = inlined_call_operand.vmem [shape: f32[1,128], index: 4, kind: input, shape index: {}]
  %s5 = inlined_call_operand.vmem [shape: f32[8,1], index: 5, kind: input, shape index: {}]
  %s6 = inlined_call_operand.hbm [shape: f32[8,128], index: 6, kind: output, shape index: {}]
  %s7 = sld [smem:[#allocation0]]
  $region42: #{tpu_custom_call.1} parent=0
    _
  %s9 = ssub.s32 1, %s7
  %s10 = scalar_select 0, %s9, %s7
  $region1: #{tpu_custom_call.1} parent=0
    #allocation2 [shape = 'u8[32768]{0}', space=vmem, size = 0x8000, scoped, tag = 'input window, operand 1, single buffered']
    #allocation3 [shape = 's32[1]{0}', space=sflag, size = 0x4, scoped, tag = 'scoped memory for tpu_custom_call.1']
    #allocation4 [shape = 's32[1]{0}', space=sflag, size = 0x4, scoped, tag = 'scoped memory for tpu_custom_call.1']
    #allocation5 [shape = 'u8[32768]{0}', space=vmem, size = 0x8000, scoped, tag = 'input window, operand 3, single buffered']
    #allocation6 [shape = 's32[1]{0}', space=sflag, size = 0x4, scoped, tag = 'scoped memory for tpu_custom_call.1']
    #allocation7 [shape = 'u8[4096]{0}', space=vmem, size = 0x1000, scoped, tag = 'output window, operand 0, single buffered']
    %11 = vsyncpa [#allocation3], 0
    %12 = vsyncpa [#allocation6], 0
    %13 = vsyncpa [#allocation4], 0
    // Predicated region
    $region2: #{tpu_custom_call.1} parent=1 // pred_check
      _
    $region3: #{tpu_custom_call.1} parent=1 // pred_check_branch
      %15 = sbr.rel (0) target = $region5
    $region4: #{tpu_custom_call.1} parent=1 // pred_region
      _
    $region5: #{tpu_custom_call.1} parent=1 // pred_fallthru
      _
    // Predicated region
    $region6: #{tpu_custom_call.1} parent=1 // pred_check
      _
    $region7: #{tpu_custom_call.1} parent=1 // pred_check_branch
      %17 = sbr.rel (0) target = $region9
    $region8: #{tpu_custom_call.1} parent=1 // pred_region
      %s19 = ssub.s32 1024, 1024
      %20 = vsyncadd [#allocation3], %s19
      %s21 = sshll.u32 [#allocation2], 4
      %s22 = int_to_ptr.vmem [resolvable:$true] %s21
      %27 = dma.hbm_to_vmem [thread:$0]  %s1, 1024, %s22, [#allocation3], 64, 64, 4
    $region9: #{tpu_custom_call.1} parent=1 // pred_fallthru
      _
    // Predicated region
    $region10: #{tpu_custom_call.1} parent=1 // pred_check
      _
    $region11: #{tpu_custom_call.1} parent=1 // pred_check_branch
      %29 = sbr.rel (0) target = $region13
    $region12: #{tpu_custom_call.1} parent=1 // pred_region
      _
    $region13: #{tpu_custom_call.1} parent=1 // pred_fallthru
      _
    // Predicated region
    $region14: #{tpu_custom_call.1} parent=1 // pred_check
      _
    $region15: #{tpu_custom_call.1} parent=1 // pred_check_branch
      %31 = sbr.rel (0) target = $region17
    $region16: #{tpu_custom_call.1} parent=1 // pred_region
      %s33 = ssub.s32 1024, 1024
      %34 = vsyncadd [#allocation6], %s33
      %s35 = sshll.u32 [#allocation5], 4
      %s36 = int_to_ptr.vmem [resolvable:$true] %s35
      %41 = dma.hbm_to_vmem [thread:$0]  %s3, 1024, %s36, [#allocation6], 64, 64, 4
    $region17: #{tpu_custom_call.1} parent=1 // pred_fallthru
      _
    // Predicated region
    $region18: #{tpu_custom_call.1} parent=1 // pred_check
      _
    $region19: #{tpu_custom_call.1} parent=1 // pred_check_branch
      %43 = sbr.rel (0) target = $region21
    $region20: #{tpu_custom_call.1} parent=1 // pred_region
      _
    $region21: #{tpu_custom_call.1} parent=1 // pred_fallthru
      _
    // Predicated region
    $region22: #{tpu_custom_call.1} parent=1 // pred_check
      _
    $region23: #{tpu_custom_call.1} parent=1 // pred_check_branch
      %45 = sbr.rel (0) target = $region25
    $region24: #{tpu_custom_call.1} parent=1 // pred_region
      _
    $region25: #{tpu_custom_call.1} parent=1 // pred_fallthru
      _
    // Predicated region
    $region26: #{tpu_custom_call.1} parent=1 // pred_check
      _
    $region27: #{tpu_custom_call.1} parent=1 // pred_check_branch
      %47 = sbr.rel (0) target = $region29
    $region28: #{tpu_custom_call.1} parent=1 // pred_region
      %48 = dma.done [#allocation3], 1024
    $region29: #{tpu_custom_call.1} parent=1 // pred_fallthru
      _
    // Predicated region
    $region30: #{tpu_custom_call.1} parent=1 // pred_check
      _
    $region31: #{tpu_custom_call.1} parent=1 // pred_check_branch
      %50 = sbr.rel (0) target = $region33
    $region32: #{tpu_custom_call.1} parent=1 // pred_region
      %51 = dma.done [#allocation6], 1024
    $region33: #{tpu_custom_call.1} parent=1 // pred_fallthru
      _
    %v53 = vld [vmem:[%s0] sm:$0xf]
    %v54 = vld [vmem:[#allocation2] sm:$0xf]
    %v55 = vld [vmem:[#allocation2 + $0x4] sm:$0xf]
    %v56 = vld [vmem:[#allocation2 + $0x8] sm:$0xf]
    %v57 = vld [vmem:[#allocation2 + $0xc] sm:$0xf]
    %v58 = vld [vmem:[#allocation2 + $0x10] sm:$0xf]
    %v59 = vld [vmem:[#allocation2 + $0x14] sm:$0xf]
    %v60 = vld [vmem:[#allocation2 + $0x18] sm:$0xf]
    %v61 = vld [vmem:[#allocation2 + $0x1c] sm:$0xf]
    %v62 = vld [vmem:[#allocation2 + $0x20] sm:$0xf]
    %v63 = vld [vmem:[#allocation2 + $0x24] sm:$0xf]
    %v64 = vld [vmem:[#allocation2 + $0x28] sm:$0xf]
    %v65 = vld [vmem:[#allocation2 + $0x2c] sm:$0xf]
    %v66 = vld [vmem:[#allocation2 + $0x30] sm:$0xf]
    %v67 = vld [vmem:[#allocation2 + $0x34] sm:$0xf]
    %v68 = vld [vmem:[#allocation2 + $0x38] sm:$0xf]
    %v69 = vld [vmem:[#allocation2 + $0x3c] sm:$0xf]
    %v70 = vld [vmem:[%s2] sm:$0x1]
    %v72 = vlaneseq
    %v73 = vshrl.u32 %v72, 7
    %v74 = vsub.s32 0, %v73
    %v75 = vrot.slane %v70, %v74
    %v93 = vunpack.c.l.b16 %v54
    %v94 = vunpack.c.l.b16 %v55
    %v95 = vunpack.c.l.b16 %v56
    %v96 = vunpack.c.l.b16 %v57
    %v97 = vunpack.c.l.b16 %v58
    %v98 = vunpack.c.l.b16 %v59
    %v99 = vunpack.c.l.b16 %v60
    %v100 = vunpack.c.l.b16 %v61
    %v101 = vunpack.c.l.b16 %v62
    %v102 = vunpack.c.l.b16 %v63
    %v103 = vunpack.c.l.b16 %v64
    %v104 = vunpack.c.l.b16 %v65
    %v105 = vunpack.c.l.b16 %v66
    %v106 = vunpack.c.l.b16 %v67
    %v107 = vunpack.c.l.b16 %v68
    %v108 = vunpack.c.l.b16 %v69
    %v109 = vpack.c.b16 %v94, %v93
    %v110 = vpack.c.b16 %v96, %v95
    %v111 = vpack.c.b16 %v98, %v97
    %v112 = vpack.c.b16 %v100, %v99
    %v113 = vpack.c.b16 %v102, %v101
    %v114 = vpack.c.b16 %v104, %v103
    %v115 = vpack.c.b16 %v106, %v105
    %v116 = vpack.c.b16 %v108, %v107
    %125 = vmatprep.subr.bf16.mxu0 0
    %126 = vmatpush1.bf16.msra.mxu0 %v109
    %127 = vmatprep.subr.bf16.mxu0 0
    %128 = vmatpush1.bf16.msra.mxu0 %v110
    %129 = vmatprep.subr.bf16.mxu0 0
    %130 = vmatpush1.bf16.msra.mxu0 %v111
    %131 = vmatprep.subr.bf16.mxu0 0
    %132 = vmatpush1.bf16.msra.mxu0 %v112
    %133 = vmatprep.subr.bf16.mxu0 0
    %134 = vmatpush1.bf16.msra.mxu0 %v113
    %135 = vmatprep.subr.bf16.mxu0 0
    %136 = vmatpush1.bf16.msra.mxu0 %v114
    %137 = vmatprep.subr.bf16.mxu0 0
    %138 = vmatpush1.bf16.msra.mxu0 %v115
    %139 = vmatprep.subr.bf16.mxu0 0
    %140 = vmatpush1.bf16.msra.mxu0 %v116
    %141 = vmatprep.subr.bf16.mxu0 0
    %142 = vmatpush1.bf16.msra.mxu0 0
    %143 = vmatprep.subr.bf16.mxu0 0
    %144 = vmatpush1.bf16.msra.mxu0 0
    %145 = vmatprep.subr.bf16.mxu0 0
    %146 = vmatpush1.bf16.msra.mxu0 0
    %147 = vmatprep.subr.bf16.mxu0 0
    %148 = vmatpush1.bf16.msra.mxu0 0
    %149 = vmatprep.subr.bf16.mxu0 0
    %150 = vmatpush1.bf16.msra.mxu0 0
    %151 = vmatprep.subr.bf16.mxu0 0
    %152 = vmatpush1.bf16.msra.mxu0 0
    %153 = vmatprep.subr.bf16.mxu0 0
    %154 = vmatpush1.bf16.msra.mxu0 0
    %155 = vmatprep.subr.bf16.mxu0 0
    %156 = vmatpush1.bf16.msra.mxu0 0
    %157 = vmatprep.mubr.bf16.mxu0 0
    %158 = vmatmul.mubr.bf16.gmra.mrb[0].mxu0 %v53
    %v159 = vpop.f32.mrb[0].mxu0
    %v160 = vadd.f32 %v75, %v159
    %v161 = vpop.f32.mrb[0].mxu0
    %v162 = vpop.f32.mrb[0].mxu0
    %v163 = vpop.f32.mrb[0].mxu0
    %164 = vdwg.mxu0
    %v165 = vmax.f32 %v160, 0.0
    %v166 = vpack.c.bf16 %v165, %v165
    %v167 = vld [vmem:[#allocation5] sm:$0xf]
    %v168 = vld [vmem:[#allocation5 + $0x4] sm:$0xf]
    %v169 = vld [vmem:[#allocation5 + $0x8] sm:$0xf]
    %v170 = vld [vmem:[#allocation5 + $0xc] sm:$0xf]
    %v171 = vld [vmem:[#allocation5 + $0x10] sm:$0xf]
    %v172 = vld [vmem:[#allocation5 + $0x14] sm:$0xf]
    %v173 = vld [vmem:[#allocation5 + $0x18] sm:$0xf]
    %v174 = vld [vmem:[#allocation5 + $0x1c] sm:$0xf]
    %v175 = vld [vmem:[#allocation5 + $0x20] sm:$0xf]
    %v176 = vld [vmem:[#allocation5 + $0x24] sm:$0xf]
    %v177 = vld [vmem:[#allocation5 + $0x28] sm:$0xf]
    %v178 = vld [vmem:[#allocation5 + $0x2c] sm:$0xf]
    %v179 = vld [vmem:[#allocation5 + $0x30] sm:$0xf]
    %v180 = vld [vmem:[#allocation5 + $0x34] sm:$0xf]
    %v181 = vld [vmem:[#allocation5 + $0x38] sm:$0xf]
    %v182 = vld [vmem:[#allocation5 + $0x3c] sm:$0xf]
    %v183 = vld [vmem:[%s4] sm:$0x1]
    %v185 = vlaneseq
    %v186 = vshrl.u32 %v185, 7
    %v187 = vsub.s32 0, %v186
    %v188 = vrot.slane %v183, %v187
    %v206 = vunpack.c.l.b16 %v167
    %v207 = vunpack.c.l.b16 %v168
    %v208 = vunpack.c.l.b16 %v169
    %v209 = vunpack.c.l.b16 %v170
    %v210 = vunpack.c.l.b16 %v171
    %v211 = vunpack.c.l.b16 %v172
    %v212 = vunpack.c.l.b16 %v173
    %v213 = vunpack.c.l.b16 %v174
    %v214 = vunpack.c.l.b16 %v175
    %v215 = vunpack.c.l.b16 %v176
    %v216 = vunpack.c.l.b16 %v177
    %v217 = vunpack.c.l.b16 %v178
    %v218 = vunpack.c.l.b16 %v179
    %v219 = vunpack.c.l.b16 %v180
    %v220 = vunpack.c.l.b16 %v181
    %v221 = vunpack.c.l.b16 %v182
    %v222 = vpack.c.b16 %v207, %v206
    %v223 = vpack.c.b16 %v209, %v208
    %v224 = vpack.c.b16 %v211, %v210
    %v225 = vpack.c.b16 %v213, %v212
    %v226 = vpack.c.b16 %v215, %v214
    %v227 = vpack.c.b16 %v217, %v216
    %v228 = vpack.c.b16 %v219, %v218
    %v229 = vpack.c.b16 %v221, %v220
    %238 = vmatprep.subr.bf16.mxu0 0
    %239 = vmatpush1.bf16.msra.mxu0 %v222
    %240 = vmatprep.subr.bf16.mxu0 0
    %241 = vmatpush1.bf16.msra.mxu0 %v223
    %242 = vmatprep.subr.bf16.mxu0 0
    %243 = vmatpush1.bf16.msra.mxu0 %v224
    %244 = vmatprep.subr.bf16.mxu0 0
    %245 = vmatpush1.bf16.msra.mxu0 %v225
    %246 = vmatprep.subr.bf16.mxu0 0
    %247 = vmatpush1.bf16.msra.mxu0 %v226
    %248 = vmatprep.subr.bf16.mxu0 0
    %249 = vmatpush1.bf16.msra.mxu0 %v227
    %250 = vmatprep.subr.bf16.mxu0 0
    %251 = vmatpush1.bf16.msra.mxu0 %v228
    %252 = vmatprep.subr.bf16.mxu0 0
    %253 = vmatpush1.bf16.msra.mxu0 %v229
    %254 = vmatprep.subr.bf16.mxu0 0
    %255 = vmatpush1.bf16.msra.mxu0 0
    %256 = vmatprep.subr.bf16.mxu0 0
    %257 = vmatpush1.bf16.msra.mxu0 0
    %258 = vmatprep.subr.bf16.mxu0 0
    %259 = vmatpush1.bf16.msra.mxu0 0
    %260 = vmatprep.subr.bf16.mxu0 0
    %261 = vmatpush1.bf16.msra.mxu0 0
    %262 = vmatprep.subr.bf16.mxu0 0
    %263 = vmatpush1.bf16.msra.mxu0 0
    %264 = vmatprep.subr.bf16.mxu0 0
    %265 = vmatpush1.bf16.msra.mxu0 0
    %266 = vmatprep.subr.bf16.mxu0 0
    %267 = vmatpush1.bf16.msra.mxu0 0
    %268 = vmatprep.subr.bf16.mxu0 0
    %269 = vmatpush1.bf16.msra.mxu0 0
    %270 = vmatprep.mubr.bf16.mxu0 0
    %271 = vmatmul.mubr.bf16.gmra.mrb[0].mxu0 %v166
    %v272 = vpop.f32.mrb[0].mxu0
    %v273 = vadd.f32 %v188, %v272
    %v274 = vpop.f32.mrb[0].mxu0
    %v275 = vpop.f32.mrb[0].mxu0
    %v276 = vpop.f32.mrb[0].mxu0
    %277 = vdwg.mxu0
    %278 = vmax.xlane.f32.xlu0 %v273
    %v279 = vpop.xlane.xlu0 %278
    %v280 = vsub.f32 %v273, %v279
    %v281 = vmul.f32 %v280, 1.442695
    %v282 = vpow.pop %v281
    %283 = vadd.xlane.f32.xlu0 %v282
    %v284 = vpop.xlane.xlu0 %283
    %v285 = vld [vmem:[%s5] sm:$0xff]
    %v286 = vrcp.pop %v284
    %v287 = vmul.f32 %v285, %v286
    %289 = vset.pattern.permute.xlu0 0
    %290 = vperm.xlu0 %289, %v287
    %v291 = vpop.permute.xlu0 %290
    %v293 = vmul.f32 %v282, %v291
    %294 = vst [vmem:[#allocation7] sm:$0xff] %v293
    // Predicated region
    $region34: #{tpu_custom_call.1} parent=1 // pred_check
      _
    $region35: #{tpu_custom_call.1} parent=1 // pred_check_branch
      %296 = sbr.rel (0) target = $region37
    $region36: #{tpu_custom_call.1} parent=1 // pred_region
      %s298 = ssub.s32 128, 128
      %299 = vsyncadd [#allocation4], %s298
      %s301 = sshll.u32 [#allocation7], 4
      %s302 = int_to_ptr.vmem [resolvable:$true] %s301
      %304 = dma.vmem_to_hbm [thread:$0]  %s302, 128, %s6, [#allocation4]
    $region37: #{tpu_custom_call.1} parent=1 // pred_fallthru
      _
    // Predicated region
    $region38: #{tpu_custom_call.1} parent=1 // pred_check
      _
    $region39: #{tpu_custom_call.1} parent=1 // pred_check_branch
      %306 = sbr.rel (0) target = $region41
    $region40: #{tpu_custom_call.1} parent=1 // pred_region
      %307 = dma.done [#allocation4], 128
    $region41: #{tpu_custom_call.1} parent=1 // pred_fallthru
      _
    %308 = vsyncpa [#allocation3], 1
    %309 = vsyncpa [#allocation6], 1
    %310 = vsyncpa [#allocation4], 1

</llo_original>
